<compile_context>
chip_gen: v5e
topology: v5e:2x2
jax: 0.10.0
libtpu: 0.0.40
codegen_flags: <defaults>
</compile_context>

<pallas_src>
import functools

import jax
import jax.numpy as jnp
from jax.experimental import pallas as pl
from jax.experimental.pallas import tpu as pltpu


_LANE = 128                            # pad class dim to this multiple
_VMEM_BLOCK_BUDGET = 4 * 1024 * 1024   # soft per-block budget for streamed operands
_VMEM_LIMIT = 64 * 1024 * 1024


def _round_up(x, m):
    return ((x + m - 1) // m) * m


def _pick_batch_tile(b, row_bytes, cap=512):
    """Largest batch tile (multiple of 8, <= cap) whose streamed block stays
    within the per-block VMEM budget. Batch overhang is safe: padded rows only
    produce garbage in rows that are dropped on writeback."""
    if b <= 8:
        return b
    tb = min(cap, b, max(8, _VMEM_BLOCK_BUDGET // max(int(row_bytes), 1)))
    return max(8, (tb // 8) * 8)


def _pick_patch_tile(p, max_tp):
    """Largest divisor of P that is a multiple of 8 and <= max_tp; falls back
    to the full P (single block) so the reduction never reads padded tokens."""
    max_tp = max(int(max_tp), 8)
    if p <= max_tp:
        return p
    for tp in range(min(p, max_tp), 7, -1):
        if p % tp == 0 and tp % 8 == 0:
            return tp
    return p


# ----------------------------------------------------------------------------
# Kernels
# ----------------------------------------------------------------------------
def _avgpool_linear_kernel(cls_ref, patch_ref, wcls_ref, wavg_ref, b_ref,
                           o_ref, sum_ref, *, inv_p):
    """ViT path with avgpool=True (n_last_blocks must be 1).

    PyTorch:
        out  = cat([blk[:, 0] for blk in inter], -1)          # [B, D]
        avg  = mean(inter[-1][:, 1:], dim=1)                  # [B, D]
        out  = cat((out[..., None], avg[..., None]), -1).reshape(B, -1)
        out  = out @ W.T + b
    Interleave folded into weights:  logits = cls@wcls + mean(patch)@wavg + b.

    Grid: (batch tiles [parallel], patch-token tiles [arbitrary reduction]).
    The patch-token sum is accumulated in f32 scratch; matmuls + bias happen
    once, at the last patch step.
    """
    pi = pl.program_id(1)

    @pl.when(pi == 0)
    def _():
        sum_ref[...] = jnp.zeros_like(sum_ref)

    # f32 accumulation of the patch-token sum for this batch tile.
    sum_ref[...] += jnp.sum(patch_ref[...], axis=1, dtype=jnp.float32)

    @pl.when(pi == pl.num_programs(1) - 1)
    def _():
        avg = sum_ref[...] * inv_p                                    # [TB, D] f32
        logits = jnp.dot(cls_ref[...], wcls_ref[...],
                         preferred_element_type=jnp.float32)          # [TB, Cp]
        logits = logits + jnp.dot(avg, wavg_ref[...],
                                  preferred_element_type=jnp.float32)
        o_ref[...] = (logits + b_ref[...]).astype(o_ref.dtype)


def _linear_kernel(feat_ref, w_ref, b_ref, o_ref):
    """Plain linear head: logits = feat @ W^T + b (W already transposed/padded)."""
    logits = jnp.dot(feat_ref[...], w_ref[...],
                     preferred_element_type=jnp.float32)
    o_ref[...] = (logits + b_ref[...]).astype(o_ref.dtype)


# ----------------------------------------------------------------------------
# pallas_call wrappers
# ----------------------------------------------------------------------------
@jax.jit
def _run_avgpool_linear(cls_tok, patch_tok, wcls, wavg, bias):
    B, D = cls_tok.shape
    _, P, _ = patch_tok.shape
    Cp = wcls.shape[1]
    itemsize = patch_tok.dtype.itemsize

    # Tile the batch ("parallel") and, if needed, the patch-token axis
    # ("arbitrary" reduction) so blocks stay VMEM-friendly even on v7x (64 MiB).
    tb = _pick_batch_tile(B, row_bytes=min(P, 64) * D * itemsize)
    tp = _pick_patch_tile(P, _VMEM_BLOCK_BUDGET // max(tb * D * itemsize, 1))
    grid = (pl.cdiv(B, tb), P // tp)

    kernel = functools.partial(_avgpool_linear_kernel, inv_p=1.0 / P)
    flops = int(2 * B * (2 * D) * Cp + B * P * D)
    bytes_accessed = int(
        cls_tok.size * cls_tok.dtype.itemsize
        + patch_tok.size * itemsize
        + (wcls.size + wavg.size) * wcls.dtype.itemsize
        + bias.size * bias.dtype.itemsize
        + B * Cp * 4)

    return pl.pallas_call(
        kernel,
        out_shape=jax.ShapeDtypeStruct((B, Cp), jnp.float32),
        grid=grid,
        in_specs=[
            pl.BlockSpec((tb, D), lambda bi, pi: (bi, 0)),          # CLS tokens
            pl.BlockSpec((tb, tp, D), lambda bi, pi: (bi, pi, 0)),  # patch tokens
            pl.BlockSpec((D, Cp), lambda bi, pi: (0, 0)),           # W (CLS half)
            pl.BlockSpec((D, Cp), lambda bi, pi: (0, 0)),           # W (avg half)
            pl.BlockSpec((1, Cp), lambda bi, pi: (0, 0)),           # bias
        ],
        out_specs=pl.BlockSpec((tb, Cp), lambda bi, pi: (bi, 0)),
        scratch_shapes=[pltpu.VMEM((tb, D), jnp.float32)],
        compiler_params=pltpu.CompilerParams(
            dimension_semantics=("parallel", "arbitrary"),
            vmem_limit_bytes=_VMEM_LIMIT),
        cost_estimate=pl.CostEstimate(
            flops=flops, transcendentals=0, bytes_accessed=bytes_accessed),
    )(cls_tok, patch_tok, wcls, wavg, bias)


@jax.jit
def _run_linear(feat, w_t, bias):
    B, F = feat.shape
    Cp = w_t.shape[1]
    itemsize = feat.dtype.itemsize

    tb = _pick_batch_tile(B, row_bytes=F * itemsize)
    grid = (pl.cdiv(B, tb),)

    flops = int(2 * B * F * Cp)
    bytes_accessed = int(feat.size * itemsize
                         + w_t.size * w_t.dtype.itemsize
                         + bias.size * bias.dtype.itemsize
                         + B * Cp * 4)

    return pl.pallas_call(
        _linear_kernel,
        out_shape=jax.ShapeDtypeStruct((B, Cp), jnp.float32),
        grid=grid,
        in_specs=[
            pl.BlockSpec((tb, F), lambda i: (i, 0)),
            pl.BlockSpec((F, Cp), lambda i: (0, 0)),
            pl.BlockSpec((1, Cp), lambda i: (0, 0)),
        ],
        out_specs=pl.BlockSpec((tb, Cp), lambda i: (i, 0)),
        compiler_params=pltpu.CompilerParams(
            dimension_semantics=("parallel",),
            vmem_limit_bytes=_VMEM_LIMIT),
        cost_estimate=pl.CostEstimate(
            flops=flops, transcendentals=0, bytes_accessed=bytes_accessed),
    )(feat, w_t, bias)


# ----------------------------------------------------------------------------
# Module-equivalent wrapper
# ----------------------------------------------------------------------------
class LinearClassifier:
    """JAX/Pallas port of the PyTorch LinearClassifier head.

    Parameters are created deterministically: weight ~ N(0, 0.01), bias = 0,
    mirroring the PyTorch __init__. All per-call weight preprocessing
    (transpose, CLS/avg interleave fold, lane padding of the class dim) is
    hoisted here so the forward only launches the kernel plus a cheap slice.
    """

    def __init__(self, key, is_vit, in_feat, num_classes=10,
                 n_last_blocks=4, avgpool=True, param_dtype=jnp.float32):
        self.is_vit = is_vit
        self.num_classes = num_classes
        self.n_last_blocks = n_last_blocks
        self.avgpool = avgpool
        # nn.Linear(in_feat, num_classes): weight [num_classes, in_feat]
        self.weight = (0.01 * jax.random.normal(
            key, (num_classes, in_feat), dtype=jnp.float32)).astype(param_dtype)
        self.bias = jnp.zeros((num_classes,), dtype=jnp.float32)

        # Lane-dense padded class dim (C -> multiple of 128): full MXU N
        # utilisation + unmasked output stores. Padding sliced off after call.
        self.c_pad = _round_up(num_classes, _LANE)
        pad = self.c_pad - num_classes
        self.w_t_pad = jnp.pad(jnp.transpose(self.weight), ((0, 0), (0, pad)))
        self.bias_pad = jnp.pad(self.bias, (0, pad)).reshape(1, self.c_pad)

        if is_vit and avgpool:
            # Fold the torch cat/interleave (CLS, avg interleaved along the
            # feature axis) into the weight: even columns act on CLS, odd on avg.
            assert in_feat % 2 == 0, "avgpool=True expects in_feat == 2 * embed_dim"
            self.wcls_pad = jnp.pad(jnp.transpose(self.weight[:, 0::2]),
                                    ((0, 0), (0, pad)))
            self.wavg_pad = jnp.pad(jnp.transpose(self.weight[:, 1::2]),
                                    ((0, 0), (0, pad)))

    def __call__(self, backbone_out):
        """backbone_out:
             - is_vit=True : list of n_last_blocks arrays [B, S, D]
                             (frozen intermediate features, CLS at index 0)
             - is_vit=False: frozen backbone output, any shape [B, ...]
        """
        if self.is_vit:
            inter = backbone_out
            if self.avgpool:
                # torch.cat of [B, n*D, 1] with [B, D, 1] requires n*D == D.
                assert self.n_last_blocks == 1, (
                    "avgpool=True is only shape-consistent with n_last_blocks=1 "
                    "(matches the PyTorch cat semantics)")
                x = inter[-1]
                cls_tok = x[:, 0, :]                       # [B, D]
                patch_tok = x[:, 1:, :]                    # [B, S-1, D]
                out = _run_avgpool_linear(cls_tok, patch_tok,
                                          self.wcls_pad, self.wavg_pad,
                                          self.bias_pad)
            else:
                feat = jnp.concatenate([blk[:, 0, :] for blk in inter], axis=-1)
                out = _run_linear(feat, self.w_t_pad, self.bias_pad)
        else:
            out_b = backbone_out
            feat = out_b.reshape(out_b.shape[0], -1)       # out.view(B, -1)
            out = _run_linear(feat, self.w_t_pad, self.bias_pad)
        return out[:, :self.num_classes]


# ----------------------------------------------------------------------------
# Pure-JAX reference (mirrors the PyTorch forward) for a sanity check
# ----------------------------------------------------------------------------
def _reference(clf, backbone_out):
    if clf.is_vit:
        inter = backbone_out
        out = jnp.concatenate([blk[:, 0] for blk in inter], axis=-1)
        if clf.avgpool:
            avg = jnp.mean(inter[-1][:, 1:], axis=1)
            out = jnp.concatenate((out[..., None], avg[..., None]), axis=-1)
            out = out.reshape(out.shape[0], -1)
    else:
        out = backbone_out
    out = out.reshape(out.shape[0], -1)
    return out @ clf.weight.T + clf.bias


# ----------------------------------------------------------------------------
if __name__ == "__main__":
    key = jax.random.PRNGKey(0)
    k_feat, k_feat2, k_cnn, k_w1, k_w2, k_w3 = jax.random.split(key, 6)

    B, S, D, C = 2, 17, 32, 10          # 1 CLS token + 16 patch tokens, embed 32

    # --- Config 1: ViT, avgpool=True, n_last_blocks=1 (DINO ViT linear eval) ---
    inter1 = [jax.random.normal(k_feat, (B, S, D), dtype=jnp.float32)]
    clf1 = LinearClassifier(k_w1, is_vit=True, in_feat=2 * D, num_classes=C,
                            n_last_blocks=1, avgpool=True)
    out1 = jax.block_until_ready(clf1(inter1))
    ref1 = _reference(clf1, inter1)
    assert out1.shape == (B, C)
    assert jnp.allclose(out1, ref1, atol=1e-5, rtol=1e-5)

    # --- Config 2: ViT, avgpool=False, n_last_blocks=4 -------------------------
    n_blocks = 4
    keys = jax.random.split(k_feat2, n_blocks)
    inter2 = [jax.random.normal(k, (B, S, D), dtype=jnp.float32) for k in keys]
    clf2 = LinearClassifier(k_w2, is_vit=True, in_feat=n_blocks * D, num_classes=C,
                            n_last_blocks=n_blocks, avgpool=False)
    out2 = jax.block_until_ready(clf2(inter2))
    ref2 = _reference(clf2, inter2)
    assert out2.shape == (B, C)
    assert jnp.allclose(out2, ref2, atol=1e-5, rtol=1e-5)

    # --- Config 3: non-ViT backbone output (e.g. CNN features, NCHW) -----------
    cnn_feat = jax.random.normal(k_cnn, (B, 4, 4, 4), dtype=jnp.float32)  # [B,C,H,W]
    clf3 = LinearClassifier(k_w3, is_vit=False, in_feat=4 * 4 * 4, num_classes=C)
    out3 = jax.block_until_ready(clf3(cnn_feat))
    ref3 = _reference(clf3, cnn_feat.reshape(B, -1))
    assert out3.shape == (B, C)
    assert jnp.allclose(out3, ref3, atol=1e-5, rtol=1e-5)

    print("KERNEL_OK")
</pallas_src>

<mosaic_0001>
module attributes {stable_mosaic.version = 11 : i64} {
  func.func @_avgpool_linear_kernel(%arg0: i32, %arg1: i32, %arg2: memref<2x32xf32, #tpu.memory_space<vmem>>, %arg3: memref<2x16x32xf32, #tpu.memory_space<vmem>>, %arg4: memref<32x128xf32, #tpu.memory_space<vmem>>, %arg5: memref<32x128xf32, #tpu.memory_space<vmem>>, %arg6: memref<1x128xf32, #tpu.memory_space<vmem>>, %arg7: memref<2x128xf32, #tpu.memory_space<vmem>>, %arg8: memref<2x32xf32, #tpu.memory_space<vmem>>) attributes {dimension_semantics = [#tpu.dimension_semantics<parallel>, #tpu.dimension_semantics<arbitrary>], iteration_bounds = array<i64: 1, 1>, scalar_prefetch = 0 : i64, scratch_operands = 1 : i64, tpu.core_type = #tpu.core_type<tc>, window_params = [{transform_indices = @transform_0, window_bounds = array<i64: 2, 32>}, {transform_indices = @transform_1, window_bounds = array<i64: 2, 16, 32>}, {pipeline_mode = #tpu.pipeline_mode<synchronous>, transform_indices = @transform_2, window_bounds = array<i64: 32, 128>}, {pipeline_mode = #tpu.pipeline_mode<synchronous>, transform_indices = @transform_3, window_bounds = array<i64: 32, 128>}, {pipeline_mode = #tpu.pipeline_mode<synchronous>, transform_indices = @transform_4, window_bounds = array<i64: 1, 128>}, {transform_indices = @transform_5, window_bounds = array<i64: 2, 128>}]} {
    %c0_i32 = arith.constant 0 : i32
    %0 = arith.cmpi eq, %arg1, %c0_i32 : i32
    %1 = arith.extui %0 : i1 to i32
    %c0_i32_0 = arith.constant 0 : i32
    %2 = arith.cmpi ne, %1, %c0_i32_0 : i32
    scf.if %2 {
      %cst_9 = arith.constant 0.000000e+00 : f32
      %11 = vector.broadcast %cst_9 : f32 to vector<2x32xf32>
      %c0_10 = arith.constant 0 : index
      %c0_11 = arith.constant 0 : index
      %12 = vector.load %arg8[%c0_10, %c0_11] : memref<2x32xf32, #tpu.memory_space<vmem>>, vector<2x32xf32>
      tpu.vector_store %arg8[%c0_10, %c0_11], %11 {strides = array<i32>} : memref<2x32xf32, #tpu.memory_space<vmem>>, vector<2x32xf32>,
    } else {
    }
    %c0 = arith.constant 0 : index
    %c0_1 = arith.constant 0 : index
    %3 = vector.load %arg8[%c0, %c0_1] : memref<2x32xf32, #tpu.memory_space<vmem>>, vector<2x32xf32>
    %c0_2 = arith.constant 0 : index
    %c0_3 = arith.constant 0 : index
    %c0_4 = arith.constant 0 : index
    %4 = vector.load %arg3[%c0_2, %c0_3, %c0_4] : memref<2x16x32xf32, #tpu.memory_space<vmem>>, vector<2x16x32xf32>
    %cst = arith.constant dense<0.000000e+00> : vector<2x32xf32>
    %5 = vector.multi_reduction <add>, %4, %cst [1] : vector<2x16x32xf32> to vector<2x32xf32>
    %6 = arith.addf %3, %5 : vector<2x32xf32>
    %c0_5 = arith.constant 0 : index
    %c0_6 = arith.constant 0 : index
    %7 = vector.load %arg8[%c0_5, %c0_6] : memref<2x32xf32, #tpu.memory_space<vmem>>, vector<2x32xf32>
    tpu.vector_store %arg8[%c0_5, %c0_6], %6 {strides = array<i32>} : memref<2x32xf32, #tpu.memory_space<vmem>>, vector<2x32xf32>,
    %c0_i32_7 = arith.constant 0 : i32
    %8 = arith.cmpi eq, %arg1, %c0_i32_7 : i32
    %9 = arith.extui %8 : i1 to i32
    %c0_i32_8 = arith.constant 0 : i32
    %10 = arith.cmpi ne, %9, %c0_i32_8 : i32
    scf.if %10 {
      %c0_9 = arith.constant 0 : index
      %c0_10 = arith.constant 0 : index
      %11 = vector.load %arg8[%c0_9, %c0_10] : memref<2x32xf32, #tpu.memory_space<vmem>>, vector<2x32xf32>
      %cst_11 = arith.constant 6.250000e-02 : f32
      %12 = vector.broadcast %cst_11 : f32 to vector<2x32xf32>
      %13 = arith.mulf %11, %12 : vector<2x32xf32>
      %c0_12 = arith.constant 0 : index
      %c0_13 = arith.constant 0 : index
      %14 = vector.load %arg2[%c0_12, %c0_13] : memref<2x32xf32, #tpu.memory_space<vmem>>, vector<2x32xf32>
      %c0_14 = arith.constant 0 : index
      %c0_15 = arith.constant 0 : index
      %15 = vector.load %arg4[%c0_14, %c0_15] : memref<32x128xf32, #tpu.memory_space<vmem>>, vector<32x128xf32>
      %cst_16 = arith.constant dense<0.000000e+00> : vector<2x128xf32>
      %16 = tpu.matmul %14, %15, %cst_16 {dimension_numbers = #tpu.dot_dimension_numbers<[1], [0], [0], [1], [0, 0, 1, 1], [], []>} : vector<2x32xf32>, vector<32x128xf32>, vector<2x128xf32> -> vector<2x128xf32>
      %c0_17 = arith.constant 0 : index
      %c0_18 = arith.constant 0 : index
      %17 = vector.load %arg5[%c0_17, %c0_18] : memref<32x128xf32, #tpu.memory_space<vmem>>, vector<32x128xf32>
      %cst_19 = arith.constant dense<0.000000e+00> : vector<2x128xf32>
      %18 = tpu.matmul %13, %17, %cst_19 {dimension_numbers = #tpu.dot_dimension_numbers<[1], [0], [0], [1], [0, 0, 1, 1], [], []>} : vector<2x32xf32>, vector<32x128xf32>, vector<2x128xf32> -> vector<2x128xf32>
      %19 = arith.addf %16, %18 : vector<2x128xf32>
      %c0_20 = arith.constant 0 : index
      %c0_21 = arith.constant 0 : index
      %20 = vector.load %arg6[%c0_20, %c0_21] : memref<1x128xf32, #tpu.memory_space<vmem>>, vector<1x128xf32>
      %21 = vector.broadcast %20 : vector<1x128xf32> to vector<2x128xf32>
      %22 = arith.addf %19, %21 : vector<2x128xf32>
      %c0_22 = arith.constant 0 : index
      %c0_23 = arith.constant 0 : index
      %23 = vector.load %arg7[%c0_22, %c0_23] : memref<2x128xf32, #tpu.memory_space<vmem>>, vector<2x128xf32>
      tpu.vector_store %arg7[%c0_22, %c0_23], %22 {strides = array<i32>} : memref<2x128xf32, #tpu.memory_space<vmem>>, vector<2x128xf32>,
    } else {
    }
    return
  }
  func.func @transform_0(%arg0: i32, %arg1: i32) -> (i32, i32) {
    %c0_i32 = arith.constant 0 : i32
    %c0_i32_0 = arith.constant 0 : i32
    return %arg0, %c0_i32 : i32, i32
  }
  func.func @transform_1(%arg0: i32, %arg1: i32) -> (i32, i32, i32) {
    %c0_i32 = arith.constant 0 : i32
    %c0_i32_0 = arith.constant 0 : i32
    return %arg0, %arg1, %c0_i32 : i32, i32, i32
  }
  func.func @transform_2(%arg0: i32, %arg1: i32) -> (i32, i32) {
    %c0_i32 = arith.constant 0 : i32
    %c0_i32_0 = arith.constant 0 : i32
    %c0_i32_1 = arith.constant 0 : i32
    return %c0_i32, %c0_i32_0 : i32, i32
  }
  func.func @transform_3(%arg0: i32, %arg1: i32) -> (i32, i32) {
    %c0_i32 = arith.constant 0 : i32
    %c0_i32_0 = arith.constant 0 : i32
    %c0_i32_1 = arith.constant 0 : i32
    return %c0_i32, %c0_i32_0 : i32, i32
  }
  func.func @transform_4(%arg0: i32, %arg1: i32) -> (i32, i32) {
    %c0_i32 = arith.constant 0 : i32
    %c0_i32_0 = arith.constant 0 : i32
    %c0_i32_1 = arith.constant 0 : i32
    return %c0_i32, %c0_i32_0 : i32, i32
  }
  func.func @transform_5(%arg0: i32, %arg1: i32) -> (i32, i32) {
    %c0_i32 = arith.constant 0 : i32
    %c0_i32_0 = arith.constant 0 : i32
    return %arg0, %c0_i32 : i32, i32
  }
}

</mosaic_0001>

<llo_original>
// kernel: _run_avgpool_linear.1
$region0: #{_run_avgpool_linear.1}
  #allocation0 [shape = 'u32[]', space=smem, size = 0x4, offset = 0x4, fixed_abs, tag = 'smem constant byte address 0x4 - core index']
  #allocation1 [shape = 'u32[72,128]{1,0:T(1,128)}', space=vmem, size = 0x9000, scoped, tag = 'internal scratch']
  #allocation2 [shape = 'f32[2,32]{1,0:T(2,128)}', space=vmem, size = 0x400, scoped, tag = 'scratch operand']
  %s0 = inlined_call_operand.hbm [shape: f32[2,32], index: 0, kind: input, shape index: {}]
  %s1 = inlined_call_operand.hbm [shape: f32[2,16,32], index: 1, kind: input, shape index: {}]
  %s2 = inlined_call_operand.hbm [shape: f32[32,128], index: 2, kind: input, shape index: {}]
  %s3 = inlined_call_operand.hbm [shape: f32[32,128], index: 3, kind: input, shape index: {}]
  %s4 = inlined_call_operand.vmem [shape: f32[1,128], index: 4, kind: input, shape index: {}]
  %s5 = inlined_call_operand.hbm [shape: f32[2,128], index: 5, kind: output, shape index: {}]
  %s6 = sld [smem:[#allocation0]]
  $region54: #{_run_avgpool_linear.1} parent=0
    _
  %s8 = ssub.s32 1, %s6
  %s9 = scalar_select 0, %s8, %s6
  $region1: #{_run_avgpool_linear.1} parent=0
    #allocation3 [shape = 'u8[1024]{0}', space=vmem, size = 0x400, scoped, tag = 'input window, operand 0, single buffered']
    #allocation4 [shape = 's32[1]{0}', space=sflag, size = 0x4, scoped, tag = 'scoped memory for _run_avgpool_linear.1']
    #allocation5 [shape = 's32[1]{0}', space=sflag, size = 0x4, scoped, tag = 'scoped memory for _run_avgpool_linear.1']
    #allocation6 [shape = 'u8[16384]{0}', space=vmem, size = 0x4000, scoped, tag = 'input window, operand 1, single buffered']
    #allocation7 [shape = 's32[1]{0}', space=sflag, size = 0x4, scoped, tag = 'scoped memory for _run_avgpool_linear.1']
    #allocation8 [shape = 'u8[16384]{0}', space=vmem, size = 0x4000, scoped, tag = 'input window, operand 2, single buffered']
    #allocation9 [shape = 'u8[16384]{0}', space=vmem, size = 0x4000, scoped, tag = 'input window, operand 3, single buffered']
    #allocation10 [shape = 's32[1]{0}', space=sflag, size = 0x4, scoped, tag = 'scoped memory for _run_avgpool_linear.1']
    #allocation11 [shape = 'u8[1024]{0}', space=vmem, size = 0x400, scoped, tag = 'output window, operand 0, single buffered']
    %10 = vsyncpa [#allocation4], 0
    %11 = vsyncpa [#allocation7], 0
    %12 = vsyncpa [#allocation10], 0
    %13 = vsyncpa [#allocation5], 0
    // Predicated region
    $region2: #{_run_avgpool_linear.1} parent=1 // pred_check
      _
    $region3: #{_run_avgpool_linear.1} parent=1 // pred_check_branch
      %15 = sbr.rel (0) target = $region5
    $region4: #{_run_avgpool_linear.1} parent=1 // pred_region
      %17 = vsyncadd [#allocation4], 0
      %s19 = sshll.u32 %s0, 4
      %s20 = int_to_ptr.hbm [resolvable:$true] %s19
      %s21 = sshll.u32 [#allocation3], 4
      %s22 = int_to_ptr.vmem [resolvable:$true] %s21
      %24 = dma.hbm_to_vmem [thread:$0]  %s20, 32, %s22, [#allocation4]
    $region5: #{_run_avgpool_linear.1} parent=1 // pred_fallthru
      _
    // Predicated region
    $region6: #{_run_avgpool_linear.1} parent=1 // pred_check
      _
    $region7: #{_run_avgpool_linear.1} parent=1 // pred_check_branch
      %26 = sbr.rel (0) target = $region9
    $region8: #{_run_avgpool_linear.1} parent=1 // pred_region
      %28 = vsyncadd [#allocation7], 0
      %s29 = sshll.u32 %s1, 4
      %s30 = int_to_ptr.hbm [resolvable:$true] %s29
      %s31 = sshll.u32 [#allocation6], 4
      %s32 = int_to_ptr.vmem [resolvable:$true] %s31
      %37 = dma.hbm_to_vmem [thread:$0]  %s30, 512, %s32, [#allocation7], 128, 128, 8
    $region9: #{_run_avgpool_linear.1} parent=1 // pred_fallthru
      _
    // Predicated region
    $region10: #{_run_avgpool_linear.1} parent=1 // pred_check
      _
    $region11: #{_run_avgpool_linear.1} parent=1 // pred_check_branch
      %39 = sbr.rel (0) target = $region13
    $region12: #{_run_avgpool_linear.1} parent=1 // pred_region
      %41 = vsyncadd [#allocation7], 0
      %s42 = sshll.u32 %s2, 4
      %s43 = int_to_ptr.hbm [resolvable:$true] %s42
      %s44 = sshll.u32 [#allocation8], 4
      %s45 = int_to_ptr.vmem [resolvable:$true] %s44
      %50 = dma.hbm_to_vmem [thread:$0]  %s43, 512, %s45, [#allocation7], 128, 128, 8
    $region13: #{_run_avgpool_linear.1} parent=1 // pred_fallthru
      _
    // Predicated region
    $region14: #{_run_avgpool_linear.1} parent=1 // pred_check
      _
    $region15: #{_run_avgpool_linear.1} parent=1 // pred_check_branch
      %52 = sbr.rel (0) target = $region17
    $region16: #{_run_avgpool_linear.1} parent=1 // pred_region
      %54 = vsyncadd [#allocation10], 0
      %s55 = sshll.u32 %s3, 4
      %s56 = int_to_ptr.hbm [resolvable:$true] %s55
      %s57 = sshll.u32 [#allocation9], 4
      %s58 = int_to_ptr.vmem [resolvable:$true] %s57
      %63 = dma.hbm_to_vmem [thread:$0]  %s56, 512, %s58, [#allocation10], 128, 128, 8
    $region17: #{_run_avgpool_linear.1} parent=1 // pred_fallthru
      _
    // Predicated region
    $region18: #{_run_avgpool_linear.1} parent=1 // pred_check
      _
    $region19: #{_run_avgpool_linear.1} parent=1 // pred_check_branch
      %65 = sbr.rel (0) target = $region21
    $region20: #{_run_avgpool_linear.1} parent=1 // pred_region
      _
    $region21: #{_run_avgpool_linear.1} parent=1 // pred_fallthru
      _
    // Predicated region
    $region22: #{_run_avgpool_linear.1} parent=1 // pred_check
      _
    $region23: #{_run_avgpool_linear.1} parent=1 // pred_check_branch
      %67 = sbr.rel (0) target = $region25
    $region24: #{_run_avgpool_linear.1} parent=1 // pred_region
      %69 = dma.done [#allocation4], 32
    $region25: #{_run_avgpool_linear.1} parent=1 // pred_fallthru
      _
    // Predicated region
    $region26: #{_run_avgpool_linear.1} parent=1 // pred_check
      _
    $region27: #{_run_avgpool_linear.1} parent=1 // pred_check_branch
      %71 = sbr.rel (0) target = $region29
    $region28: #{_run_avgpool_linear.1} parent=1 // pred_region
      %73 = dma.done [#allocation7], 512
    $region29: #{_run_avgpool_linear.1} parent=1 // pred_fallthru
      _
    // Predicated region
    $region30: #{_run_avgpool_linear.1} parent=1 // pred_check
      _
    $region31: #{_run_avgpool_linear.1} parent=1 // pred_check_branch
      %75 = sbr.rel (0) target = $region33
    $region32: #{_run_avgpool_linear.1} parent=1 // pred_region
      %77 = dma.done [#allocation7], 512
    $region33: #{_run_avgpool_linear.1} parent=1 // pred_fallthru
      _
    // Predicated region
    $region34: #{_run_avgpool_linear.1} parent=1 // pred_check
      _
    $region35: #{_run_avgpool_linear.1} parent=1 // pred_check_branch
      %79 = sbr.rel (0) target = $region37
    $region36: #{_run_avgpool_linear.1} parent=1 // pred_region
      %81 = dma.done [#allocation10], 512
    $region37: #{_run_avgpool_linear.1} parent=1 // pred_fallthru
      _
    %p82 = scmp.eq.s32.totalorder 0, 0
    // Predicated region
    $region38: #{_run_avgpool_linear.1} parent=1 // pred_check
      %p83 = pneg %p82
    $region39: #{_run_avgpool_linear.1} parent=1 // pred_check_branch
      %85 = sbr.rel (%p83) target = $region41
    $region40: #{_run_avgpool_linear.1} parent=1 // pred_region
      %vm86 = vcmask 254976
      %87 = vst.msk [vmem:[#allocation2] sm:$0x3] %vm86, 0.0
    $region41: #{_run_avgpool_linear.1} parent=1 // pred_fallthru
      _
    %v88 = vld [vmem:[#allocation2] sm:$0x3]
    %v89 = vld [vmem:[#allocation6] sm:$0xff]
    %v90 = vld [vmem:[#allocation6 + $0x8] sm:$0xff]
    %v91 = vld [vmem:[#allocation6 + $0x10] sm:$0xff]
    %v92 = vld [vmem:[#allocation6 + $0x18] sm:$0xff]
    %vm93 = vcmask 261120
    %v94 = vsel %vm93, %v89, 0.0
    %v95 = vsel %vm93, %v90, 0.0
    %v96 = vadd.f32 %v94, %v95
    %v97 = vrot.slane %v96, 4
    %v98 = vadd.f32 %v96, %v97
    %v99 = vrot.slane %v98, 2
    %v100 = vadd.f32 %v98, %v99
    %v101 = vrot.slane %v100, 1
    %v102 = vadd.f32 %v100, %v101
    %v103 = vsel %vm93, %v91, 0.0
    %v104 = vsel %vm93, %v92, 0.0
    %v105 = vadd.f32 %v103, %v104
    %v106 = vrot.slane %v105, 4
    %v107 = vadd.f32 %v105, %v106
    %v108 = vrot.slane %v107, 2
    %v109 = vadd.f32 %v107, %v108
    %v110 = vrot.slane %v109, 1
    %v111 = vadd.f32 %v109, %v110
    %vm114 = vcmask 1041409
    %v115 = vsel %vm114, %v111, %v102
    %v117 = vadd.f32 %v88, %v115
    %vm118 = vcmask 254976
    %119 = vst.msk [vmem:[#allocation2] sm:$0x3] %vm118, %v117
    // Predicated region
    $region42: #{_run_avgpool_linear.1} parent=1 // pred_check
      %p120 = pneg %p82
    $region43: #{_run_avgpool_linear.1} parent=1 // pred_check_branch
      %122 = sbr.rel (%p120) target = $region45
    $region44: #{_run_avgpool_linear.1} parent=1 // pred_region
      %v123 = vld [vmem:[#allocation2] sm:$0x3]
      %v124 = vmul.f32 %v123, 0.0625
      %v125 = vld [vmem:[#allocation3] sm:$0x3]
      %v126 = vld [vmem:[#allocation8] sm:$0xff]
      %v127 = vld [vmem:[#allocation8 + $0x8] sm:$0xff]
      %v128 = vld [vmem:[#allocation8 + $0x10] sm:$0xff]
      %v129 = vld [vmem:[#allocation8 + $0x18] sm:$0xff]
      %v130 = vld [vmem:[#allocation9] sm:$0xff]
      %v131 = vld [vmem:[#allocation9 + $0x8] sm:$0xff]
      %v132 = vld [vmem:[#allocation9 + $0x10] sm:$0xff]
      %v133 = vld [vmem:[#allocation9 + $0x18] sm:$0xff]
      %v135 = vsel %vm93, %v124, 0
      %137 = vmatpush.msra.mxu0 0.0
      %138 = vmatpush.msra.mxu0 0.0
      %139 = vmatpush.msra.mxu0 0.0
      %140 = vmatpush.msra.mxu0 0.0
      %141 = vmatpush.msra.mxu0 0.0
      %142 = vmatpush.msra.mxu0 0.0
      %143 = vmatpush.msra.mxu0 0.0
      %144 = vmatpush.msra.mxu0 0.0
      %145 = vmatpush.msra.mxu0 0.0
      %146 = vmatpush.msra.mxu0 0.0
      %147 = vmatpush.msra.mxu0 0.0
      %148 = vmatpush.msra.mxu0 0.0
      %149 = vmatpush.msra.mxu0 %v133
      %150 = vmatpush.msra.mxu0 %v132
      %151 = vmatpush.msra.mxu0 %v131
      %152 = vmatpush.msra.mxu0 %v130
      %153 = vmatmul.f32.gmra.mxu0 %v135
      %v154 = vpop.f32.mrf.mxu0
      %v155 = vadd.f32 0.0, %v154
      %156 = vdwg.mxu0
      %v158 = vsel %vm93, %v125, 0
      %160 = vmatpush.msra.mxu0 0.0
      %161 = vmatpush.msra.mxu0 0.0
      %162 = vmatpush.msra.mxu0 0.0
      %163 = vmatpush.msra.mxu0 0.0
      %164 = vmatpush.msra.mxu0 0.0
      %165 = vmatpush.msra.mxu0 0.0
      %166 = vmatpush.msra.mxu0 0.0
      %167 = vmatpush.msra.mxu0 0.0
      %168 = vmatpush.msra.mxu0 0.0
      %169 = vmatpush.msra.mxu0 0.0
      %170 = vmatpush.msra.mxu0 0.0
      %171 = vmatpush.msra.mxu0 0.0
      %172 = vmatpush.msra.mxu0 %v129
      %173 = vmatpush.msra.mxu0 %v128
      %174 = vmatpush.msra.mxu0 %v127
      %175 = vmatpush.msra.mxu0 %v126
      %176 = vmatmul.f32.gmra.mxu0 %v158
      %v177 = vpop.f32.mrf.mxu0
      %v178 = vadd.f32 %v155, %v177
      %179 = vdwg.mxu0
      %v180 = vld [vmem:[%s4] sm:$0x1]
      %v182 = vperm.slane %v180, 0
      %v184 = vadd.f32 %v178, %v182
      %185 = vst [vmem:[#allocation11] sm:$0x3] %v184
    $region45: #{_run_avgpool_linear.1} parent=1 // pred_fallthru
      _
    // Predicated region
    $region46: #{_run_avgpool_linear.1} parent=1 // pred_check
      _
    $region47: #{_run_avgpool_linear.1} parent=1 // pred_check_branch
      %187 = sbr.rel (0) target = $region49
    $region48: #{_run_avgpool_linear.1} parent=1 // pred_region
      %189 = vsyncadd [#allocation5], 0
      %s191 = sshll.u32 [#allocation11], 4
      %s192 = int_to_ptr.vmem [resolvable:$true] %s191
      %s193 = sshll.u32 %s5, 4
      %s194 = int_to_ptr.hbm [resolvable:$true] %s193
      %196 = dma.vmem_to_hbm [thread:$0]  %s192, 32, %s194, [#allocation5]
    $region49: #{_run_avgpool_linear.1} parent=1 // pred_fallthru
      _
    // Predicated region
    $region50: #{_run_avgpool_linear.1} parent=1 // pred_check
      _
    $region51: #{_run_avgpool_linear.1} parent=1 // pred_check_branch
      %198 = sbr.rel (0) target = $region53
    $region52: #{_run_avgpool_linear.1} parent=1 // pred_region
      %200 = dma.done [#allocation5], 32
    $region53: #{_run_avgpool_linear.1} parent=1 // pred_fallthru
      _
    %201 = vsyncpa [#allocation4], 1
    %202 = vsyncpa [#allocation7], 1
    %203 = vsyncpa [#allocation10], 1
    %204 = vsyncpa [#allocation5], 1

</llo_original>
